<compile_context>
chip_gen: v7x
topology: tpu7x:2x2x1
jax: 0.10.0
libtpu: 0.0.40
codegen_flags: <defaults>
</compile_context>

<pallas_src>
import math
import jax
import jax.numpy as jnp
from jax.experimental import pallas as pl
from jax.experimental.pallas import tpu as pltpu


def _round_up(n, m):
    return ((n + m - 1) // m) * m


def xavier_uniform(key, fan_in, fan_out, dtype=jnp.float32):
    # Matches torch.nn.init.xavier_uniform_ bound: sqrt(6 / (fan_in + fan_out))
    bound = math.sqrt(6.0 / (fan_in + fan_out))
    return jax.random.uniform(key, (fan_in, fan_out), dtype=dtype,
                              minval=-bound, maxval=bound)


def init_params(key, input_dim, hidden_dim, output_dim):
    """Weights stored transposed vs. PyTorch as (in, out), zero-padded to 128 lanes."""
    h2 = hidden_dim // 2
    k1, k2, k3 = jax.random.split(key, 3)

    d_in_p = _round_up(input_dim, 128)
    d_h_p = _round_up(hidden_dim, 128)
    d_h2_p = _round_up(h2, 128)
    d_out_p = _round_up(output_dim, 128)
    pb = max(d_h_p, d_h2_p, d_out_p)

    def pad_w(w, rp, cp):
        return jnp.zeros((rp, cp), jnp.float32).at[: w.shape[0], : w.shape[1]].set(w)

    params = {
        "w1": pad_w(xavier_uniform(k1, input_dim, hidden_dim), d_in_p, d_h_p),
        "w2": pad_w(xavier_uniform(k2, hidden_dim, h2), d_h_p, d_h2_p),
        "w3": pad_w(xavier_uniform(k3, h2, output_dim), d_h2_p, d_out_p),
        # Row 0: b1, row 1: b2, row 2: b3 (all zero-init, like nn.init.zeros_).
        "bias": jnp.zeros((3, pb), jnp.float32),
        "dims": (input_dim, hidden_dim, h2, output_dim),
    }
    return params


def baseline_model_forward(x, params):
    """x: (B, input_dim) float32.  Returns (B, output_dim) float32."""
    w1, w2, w3, bias = params["w1"], params["w2"], params["w3"], params["bias"]
    d_in, d_h, d_h2, d_out = params["dims"]

    d_in_p, d_h_p = w1.shape
    d_h2_p = w2.shape[1]
    d_out_p = w3.shape[1]

    B = x.shape[0]
    # Batch tile: 128 rows for real batches, a single 8-row-aligned tile otherwise.
    tb = 128 if B > 128 else _round_up(max(B, 8), 8)
    bp = _round_up(B, tb)

    # Zero-pad the input into a lane-dense (bp, d_in_p) slab.
    x_p = jnp.zeros((bp, d_in_p), jnp.float32).at[:B, :d_in].set(x)

    def mlp_kernel(x_ref, w1_ref, w2_ref, w3_ref, b_ref, out_ref):
        b = b_ref[...]
        xb = x_ref[...]
        z1 = jnp.dot(xb, w1_ref[...], preferred_element_type=jnp.float32) + b[0:1, :d_h_p]
        z1 = jnp.maximum(z1, 0.0)
        z2 = jnp.dot(z1, w2_ref[...], preferred_element_type=jnp.float32) + b[1:2, :d_h2_p]
        z2 = jnp.maximum(z2, 0.0)
        z3 = jnp.dot(z2, w3_ref[...], preferred_element_type=jnp.float32) + b[2:3, :d_out_p]
        out_ref[...] = z3.astype(out_ref.dtype)

    flops = 2 * bp * (d_in_p * d_h_p + d_h_p * d_h2_p + d_h2_p * d_out_p)
    bytes_accessed = 4 * (bp * d_in_p + d_in_p * d_h_p + d_h_p * d_h2_p
                          + d_h2_p * d_out_p + bp * d_out_p + bias.size)

    out_p = pl.pallas_call(
        mlp_kernel,
        out_shape=jax.ShapeDtypeStruct((bp, d_out_p), jnp.float32),
        grid=(bp // tb,),
        in_specs=[
            pl.BlockSpec((tb, d_in_p), lambda i: (i, 0)),   # batch-tiled activations
            pl.BlockSpec(w1.shape, lambda i: (0, 0)),        # VMEM-resident weights
            pl.BlockSpec(w2.shape, lambda i: (0, 0)),
            pl.BlockSpec(w3.shape, lambda i: (0, 0)),
            pl.BlockSpec(bias.shape, lambda i: (0, 0)),      # packed biases, one DMA
        ],
        out_specs=pl.BlockSpec((tb, d_out_p), lambda i: (i, 0)),
        compiler_params=pltpu.CompilerParams(
            dimension_semantics=("parallel",)),
        cost_estimate=pl.CostEstimate(
            flops=flops, transcendentals=0, bytes_accessed=bytes_accessed),
    )(x_p, w1, w2, w3, bias)

    # Slice valid rows / columns back out of the padded slab.
    return out_p[:B, :d_out]


if __name__ == "__main__":
    input_dim, hidden_dim, output_dim = 32, 32, 8
    batch = 8

    key = jax.random.PRNGKey(0)
    kx, kp = jax.random.split(key)
    x = jax.random.normal(kx, (batch, input_dim), dtype=jnp.float32)
    params = init_params(kp, input_dim, hidden_dim, output_dim)

    out = baseline_model_forward(x, params)
    jax.block_until_ready(out)
    assert out.shape == (batch, output_dim)

    # Reference in plain JAX using the unpadded weight sub-blocks.
    h2 = hidden_dim // 2
    w1u = params["w1"][:input_dim, :hidden_dim]
    w2u = params["w2"][:hidden_dim, :h2]
    w3u = params["w3"][:h2, :output_dim]
    b1u = params["bias"][0, :hidden_dim]
    b2u = params["bias"][1, :h2]
    b3u = params["bias"][2, :output_dim]
    z = jnp.maximum(x @ w1u + b1u, 0.0)
    z = jnp.maximum(z @ w2u + b2u, 0.0)
    ref = z @ w3u + b3u

    assert jnp.allclose(out, ref, atol=1e-5, rtol=1e-5), "mismatch vs. JAX reference"
    print("KERNEL_OK")
</pallas_src>

<mosaic_0001>
module attributes {stable_mosaic.version = 11 : i64} {
  func.func @mlp_kernel(%arg0: i32, %arg1: memref<8x128xf32, #tpu.memory_space<vmem>>, %arg2: memref<128x128xf32, #tpu.memory_space<vmem>>, %arg3: memref<128x128xf32, #tpu.memory_space<vmem>>, %arg4: memref<128x128xf32, #tpu.memory_space<vmem>>, %arg5: memref<3x128xf32, #tpu.memory_space<vmem>>, %arg6: memref<8x128xf32, #tpu.memory_space<vmem>>) attributes {dimension_semantics = [#tpu.dimension_semantics<parallel>], iteration_bounds = array<i64: 1>, scalar_prefetch = 0 : i64, scratch_operands = 0 : i64, tpu.core_type = #tpu.core_type<tc>, window_params = [{transform_indices = @transform_0, window_bounds = array<i64: 8, 128>}, {pipeline_mode = #tpu.pipeline_mode<synchronous>, transform_indices = @transform_1, window_bounds = array<i64: 128, 128>}, {pipeline_mode = #tpu.pipeline_mode<synchronous>, transform_indices = @transform_2, window_bounds = array<i64: 128, 128>}, {pipeline_mode = #tpu.pipeline_mode<synchronous>, transform_indices = @transform_3, window_bounds = array<i64: 128, 128>}, {pipeline_mode = #tpu.pipeline_mode<synchronous>, transform_indices = @transform_4, window_bounds = array<i64: 3, 128>}, {transform_indices = @transform_5, window_bounds = array<i64: 8, 128>}]} {
    %c0 = arith.constant 0 : index
    %c0_0 = arith.constant 0 : index
    %0 = vector.load %arg5[%c0, %c0_0] : memref<3x128xf32, #tpu.memory_space<vmem>>, vector<3x128xf32>
    %c0_1 = arith.constant 0 : index
    %c0_2 = arith.constant 0 : index
    %1 = vector.load %arg1[%c0_1, %c0_2] : memref<8x128xf32, #tpu.memory_space<vmem>>, vector<8x128xf32>
    %c0_3 = arith.constant 0 : index
    %c0_4 = arith.constant 0 : index
    %2 = vector.load %arg2[%c0_3, %c0_4] : memref<128x128xf32, #tpu.memory_space<vmem>>, vector<128x128xf32>
    %cst = arith.constant dense<0.000000e+00> : vector<8x128xf32>
    %3 = tpu.matmul %1, %2, %cst {dimension_numbers = #tpu.dot_dimension_numbers<[1], [0], [0], [1], [0, 0, 1, 1], [], []>} : vector<8x128xf32>, vector<128x128xf32>, vector<8x128xf32> -> vector<8x128xf32>
    %4 = vector.extract_strided_slice %0 {offsets = [0, 0], sizes = [1, 128], strides = [1, 1]} : vector<3x128xf32> to vector<1x128xf32>
    %5 = vector.broadcast %4 : vector<1x128xf32> to vector<8x128xf32>
    %6 = arith.addf %3, %5 : vector<8x128xf32>
    %cst_5 = arith.constant 0.000000e+00 : f32
    %7 = vector.broadcast %cst_5 : f32 to vector<8x128xf32>
    %8 = arith.maximumf %6, %7 : vector<8x128xf32>
    %c0_6 = arith.constant 0 : index
    %c0_7 = arith.constant 0 : index
    %9 = vector.load %arg3[%c0_6, %c0_7] : memref<128x128xf32, #tpu.memory_space<vmem>>, vector<128x128xf32>
    %cst_8 = arith.constant dense<0.000000e+00> : vector<8x128xf32>
    %10 = tpu.matmul %8, %9, %cst_8 {dimension_numbers = #tpu.dot_dimension_numbers<[1], [0], [0], [1], [0, 0, 1, 1], [], []>} : vector<8x128xf32>, vector<128x128xf32>, vector<8x128xf32> -> vector<8x128xf32>
    %11 = vector.extract_strided_slice %0 {offsets = [1, 0], sizes = [1, 128], strides = [1, 1]} : vector<3x128xf32> to vector<1x128xf32>
    %12 = vector.broadcast %11 : vector<1x128xf32> to vector<8x128xf32>
    %13 = arith.addf %10, %12 : vector<8x128xf32>
    %cst_9 = arith.constant 0.000000e+00 : f32
    %14 = vector.broadcast %cst_9 : f32 to vector<8x128xf32>
    %15 = arith.maximumf %13, %14 : vector<8x128xf32>
    %c0_10 = arith.constant 0 : index
    %c0_11 = arith.constant 0 : index
    %16 = vector.load %arg4[%c0_10, %c0_11] : memref<128x128xf32, #tpu.memory_space<vmem>>, vector<128x128xf32>
    %cst_12 = arith.constant dense<0.000000e+00> : vector<8x128xf32>
    %17 = tpu.matmul %15, %16, %cst_12 {dimension_numbers = #tpu.dot_dimension_numbers<[1], [0], [0], [1], [0, 0, 1, 1], [], []>} : vector<8x128xf32>, vector<128x128xf32>, vector<8x128xf32> -> vector<8x128xf32>
    %18 = vector.extract_strided_slice %0 {offsets = [2, 0], sizes = [1, 128], strides = [1, 1]} : vector<3x128xf32> to vector<1x128xf32>
    %19 = vector.broadcast %18 : vector<1x128xf32> to vector<8x128xf32>
    %20 = arith.addf %17, %19 : vector<8x128xf32>
    %c0_13 = arith.constant 0 : index
    %c0_14 = arith.constant 0 : index
    %21 = vector.load %arg6[%c0_13, %c0_14] : memref<8x128xf32, #tpu.memory_space<vmem>>, vector<8x128xf32>
    tpu.vector_store %arg6[%c0_13, %c0_14], %20 {strides = array<i32>} : memref<8x128xf32, #tpu.memory_space<vmem>>, vector<8x128xf32>,
    return
  }
  func.func @transform_0(%arg0: i32) -> (i32, i32) {
    %c0_i32 = arith.constant 0 : i32
    %c0_i32_0 = arith.constant 0 : i32
    return %arg0, %c0_i32 : i32, i32
  }
  func.func @transform_1(%arg0: i32) -> (i32, i32) {
    %c0_i32 = arith.constant 0 : i32
    %c0_i32_0 = arith.constant 0 : i32
    %c0_i32_1 = arith.constant 0 : i32
    return %c0_i32, %c0_i32_0 : i32, i32
  }
  func.func @transform_2(%arg0: i32) -> (i32, i32) {
    %c0_i32 = arith.constant 0 : i32
    %c0_i32_0 = arith.constant 0 : i32
    %c0_i32_1 = arith.constant 0 : i32
    return %c0_i32, %c0_i32_0 : i32, i32
  }
  func.func @transform_3(%arg0: i32) -> (i32, i32) {
    %c0_i32 = arith.constant 0 : i32
    %c0_i32_0 = arith.constant 0 : i32
    %c0_i32_1 = arith.constant 0 : i32
    return %c0_i32, %c0_i32_0 : i32, i32
  }
  func.func @transform_4(%arg0: i32) -> (i32, i32) {
    %c0_i32 = arith.constant 0 : i32
    %c0_i32_0 = arith.constant 0 : i32
    %c0_i32_1 = arith.constant 0 : i32
    return %c0_i32, %c0_i32_0 : i32, i32
  }
  func.func @transform_5(%arg0: i32) -> (i32, i32) {
    %c0_i32 = arith.constant 0 : i32
    %c0_i32_0 = arith.constant 0 : i32
    return %arg0, %c0_i32 : i32, i32
  }
}

</mosaic_0001>

<llo_original>
// kernel: tpu_custom_call.1
$region0: #{tpu_custom_call.1}
  #allocation0 [shape = 'u32[]', space=smem, size = 0x4, offset = 0x4, fixed_abs, tag = 'smem constant byte address 0x4 - core index']
  #allocation1 [shape = 'u32[144,128]{1,0:T(1,128)}', space=vmem, size = 0x12000, scoped, tag = 'internal scratch']
  %s0 = inlined_call_operand.hbm [shape: f32[8,128], index: 0, kind: input, shape index: {}]
  %s1 = inlined_call_operand.hbm [shape: f32[128,128], index: 1, kind: input, shape index: {}]
  %s2 = inlined_call_operand.hbm [shape: f32[128,128], index: 2, kind: input, shape index: {}]
  %s3 = inlined_call_operand.hbm [shape: f32[128,128], index: 3, kind: input, shape index: {}]
  %s4 = inlined_call_operand.vmem [shape: f32[3,128], index: 4, kind: input, shape index: {}]
  %s5 = inlined_call_operand.hbm [shape: f32[8,128], index: 5, kind: output, shape index: {}]
  %s6 = sld [smem:[#allocation0]]
  $region46: #{tpu_custom_call.1} parent=0
    _
  %s8 = ssub.s32 1, %s6
  %s9 = scalar_select 0, %s8, %s6
  $region1: #{tpu_custom_call.1} parent=0
    #allocation2 [shape = 'u8[4096]{0}', space=vmem, size = 0x1000, scoped, tag = 'input window, operand 0, single buffered']
    #allocation3 [shape = 's32[1]{0}', space=sflag, size = 0x4, scoped, tag = 'scoped memory for tpu_custom_call.1']
    #allocation4 [shape = 's32[1]{0}', space=sflag, size = 0x4, scoped, tag = 'scoped memory for tpu_custom_call.1']
    #allocation5 [shape = 'u8[65536]{0}', space=vmem, size = 0x10000, scoped, tag = 'input window, operand 1, single buffered']
    #allocation6 [shape = 's32[1]{0}', space=sflag, size = 0x4, scoped, tag = 'scoped memory for tpu_custom_call.1']
    #allocation7 [shape = 'u8[65536]{0}', space=vmem, size = 0x10000, scoped, tag = 'input window, operand 2, single buffered']
    #allocation8 [shape = 'u8[65536]{0}', space=vmem, size = 0x10000, scoped, tag = 'input window, operand 3, single buffered']
    #allocation9 [shape = 's32[1]{0}', space=sflag, size = 0x4, scoped, tag = 'scoped memory for tpu_custom_call.1']
    #allocation10 [shape = 'u8[4096]{0}', space=vmem, size = 0x1000, scoped, tag = 'output window, operand 0, single buffered']
    %10 = vsyncpa [#allocation3], 0
    %11 = vsyncpa [#allocation6], 0
    %12 = vsyncpa [#allocation9], 0
    %13 = vsyncpa [#allocation4], 0
    // Predicated region
    $region2: #{tpu_custom_call.1} parent=1 // pred_check
      _
    $region3: #{tpu_custom_call.1} parent=1 // pred_check_branch
      %15 = sbr.rel (0) target = $region5
    $region4: #{tpu_custom_call.1} parent=1 // pred_region
      %s17 = ssub.s32 128, 128
      %18 = vsyncadd [#allocation3], %s17
      %s20 = sshll.u32 [#allocation2], 4
      %s21 = int_to_ptr.vmem [resolvable:$true] %s20
      %23 = dma.hbm_to_vmem [thread:$0]  %s0, 128, %s21, [#allocation3]
    $region5: #{tpu_custom_call.1} parent=1 // pred_fallthru
      _
    // Predicated region
    $region6: #{tpu_custom_call.1} parent=1 // pred_check
      _
    $region7: #{tpu_custom_call.1} parent=1 // pred_check_branch
      %25 = sbr.rel (0) target = $region9
    $region8: #{tpu_custom_call.1} parent=1 // pred_region
      %s27 = ssub.s32 2048, 2048
      %28 = vsyncadd [#allocation6], %s27
      %s29 = sshll.u32 [#allocation5], 4
      %s30 = int_to_ptr.vmem [resolvable:$true] %s29
      %35 = dma.hbm_to_vmem [thread:$0]  %s1, 2048, %s30, [#allocation6], 128, 128, 8
    $region9: #{tpu_custom_call.1} parent=1 // pred_fallthru
      _
    // Predicated region
    $region10: #{tpu_custom_call.1} parent=1 // pred_check
      _
    $region11: #{tpu_custom_call.1} parent=1 // pred_check_branch
      %37 = sbr.rel (0) target = $region13
    $region12: #{tpu_custom_call.1} parent=1 // pred_region
      %s39 = ssub.s32 2048, 2048
      %40 = vsyncadd [#allocation6], %s39
      %s41 = sshll.u32 [#allocation7], 4
      %s42 = int_to_ptr.vmem [resolvable:$true] %s41
      %47 = dma.hbm_to_vmem [thread:$0]  %s2, 2048, %s42, [#allocation6], 128, 128, 8
    $region13: #{tpu_custom_call.1} parent=1 // pred_fallthru
      _
    // Predicated region
    $region14: #{tpu_custom_call.1} parent=1 // pred_check
      _
    $region15: #{tpu_custom_call.1} parent=1 // pred_check_branch
      %49 = sbr.rel (0) target = $region17
    $region16: #{tpu_custom_call.1} parent=1 // pred_region
      %s51 = ssub.s32 2048, 2048
      %52 = vsyncadd [#allocation9], %s51
      %s53 = sshll.u32 [#allocation8], 4
      %s54 = int_to_ptr.vmem [resolvable:$true] %s53
      %59 = dma.hbm_to_vmem [thread:$0]  %s3, 2048, %s54, [#allocation9], 128, 128, 8
    $region17: #{tpu_custom_call.1} parent=1 // pred_fallthru
      _
    // Predicated region
    $region18: #{tpu_custom_call.1} parent=1 // pred_check
      _
    $region19: #{tpu_custom_call.1} parent=1 // pred_check_branch
      %61 = sbr.rel (0) target = $region21
    $region20: #{tpu_custom_call.1} parent=1 // pred_region
      _
    $region21: #{tpu_custom_call.1} parent=1 // pred_fallthru
      _
    // Predicated region
    $region22: #{tpu_custom_call.1} parent=1 // pred_check
      _
    $region23: #{tpu_custom_call.1} parent=1 // pred_check_branch
      %63 = sbr.rel (0) target = $region25
    $region24: #{tpu_custom_call.1} parent=1 // pred_region
      %64 = dma.done [#allocation3], 128
    $region25: #{tpu_custom_call.1} parent=1 // pred_fallthru
      _
    // Predicated region
    $region26: #{tpu_custom_call.1} parent=1 // pred_check
      _
    $region27: #{tpu_custom_call.1} parent=1 // pred_check_branch
      %66 = sbr.rel (0) target = $region29
    $region28: #{tpu_custom_call.1} parent=1 // pred_region
      %67 = dma.done [#allocation6], 2048
    $region29: #{tpu_custom_call.1} parent=1 // pred_fallthru
      _
    // Predicated region
    $region30: #{tpu_custom_call.1} parent=1 // pred_check
      _
    $region31: #{tpu_custom_call.1} parent=1 // pred_check_branch
      %69 = sbr.rel (0) target = $region33
    $region32: #{tpu_custom_call.1} parent=1 // pred_region
      %70 = dma.done [#allocation6], 2048
    $region33: #{tpu_custom_call.1} parent=1 // pred_fallthru
      _
    // Predicated region
    $region34: #{tpu_custom_call.1} parent=1 // pred_check
      _
    $region35: #{tpu_custom_call.1} parent=1 // pred_check_branch
      %72 = sbr.rel (0) target = $region37
    $region36: #{tpu_custom_call.1} parent=1 // pred_region
      %73 = dma.done [#allocation9], 2048
    $region37: #{tpu_custom_call.1} parent=1 // pred_fallthru
      _
    %v74 = vld [vmem:[%s4] sm:$0x7]
    %v75 = vld [vmem:[#allocation2] sm:$0xff]
    %v76 = vld [vmem:[#allocation5] sm:$0xff]
    %v77 = vld [vmem:[#allocation5 + $0x8] sm:$0xff]
    %v78 = vld [vmem:[#allocation5 + $0x10] sm:$0xff]
    %v79 = vld [vmem:[#allocation5 + $0x18] sm:$0xff]
    %v80 = vld [vmem:[#allocation5 + $0x20] sm:$0xff]
    %v81 = vld [vmem:[#allocation5 + $0x28] sm:$0xff]
    %v82 = vld [vmem:[#allocation5 + $0x30] sm:$0xff]
    %v83 = vld [vmem:[#allocation5 + $0x38] sm:$0xff]
    %v84 = vld [vmem:[#allocation5 + $0x40] sm:$0xff]
    %v85 = vld [vmem:[#allocation5 + $0x48] sm:$0xff]
    %v86 = vld [vmem:[#allocation5 + $0x50] sm:$0xff]
    %v87 = vld [vmem:[#allocation5 + $0x58] sm:$0xff]
    %v88 = vld [vmem:[#allocation5 + $0x60] sm:$0xff]
    %v89 = vld [vmem:[#allocation5 + $0x68] sm:$0xff]
    %v90 = vld [vmem:[#allocation5 + $0x70] sm:$0xff]
    %v91 = vld [vmem:[#allocation5 + $0x78] sm:$0xff]
    %v92 = vlaneseq
    %v93 = vshrl.u32 %v92, 7
    %v94 = vsub.s32 0, %v93
    %v95 = vrot.slane %v74, %v94
    %96 = vmatprep.subr.mxu0 0.0
    %97 = vmatpush1.msra.mxu0 %v76
    %98 = vmatprep.subr.mxu0 0.0
    %99 = vmatpush1.msra.mxu0 %v77
    %100 = vmatprep.subr.mxu0 0.0
    %101 = vmatpush1.msra.mxu0 %v78
    %102 = vmatprep.subr.mxu0 0.0
    %103 = vmatpush1.msra.mxu0 %v79
    %104 = vmatprep.subr.mxu0 0.0
    %105 = vmatpush1.msra.mxu0 %v80
    %106 = vmatprep.subr.mxu0 0.0
    %107 = vmatpush1.msra.mxu0 %v81
    %108 = vmatprep.subr.mxu0 0.0
    %109 = vmatpush1.msra.mxu0 %v82
    %110 = vmatprep.subr.mxu0 0.0
    %111 = vmatpush1.msra.mxu0 %v83
    %112 = vmatprep.subr.mxu0 0.0
    %113 = vmatpush1.msra.mxu0 %v84
    %114 = vmatprep.subr.mxu0 0.0
    %115 = vmatpush1.msra.mxu0 %v85
    %116 = vmatprep.subr.mxu0 0.0
    %117 = vmatpush1.msra.mxu0 %v86
    %118 = vmatprep.subr.mxu0 0.0
    %119 = vmatpush1.msra.mxu0 %v87
    %120 = vmatprep.subr.mxu0 0.0
    %121 = vmatpush1.msra.mxu0 %v88
    %122 = vmatprep.subr.mxu0 0.0
    %123 = vmatpush1.msra.mxu0 %v89
    %124 = vmatprep.subr.mxu0 0.0
    %125 = vmatpush1.msra.mxu0 %v90
    %126 = vmatprep.subr.mxu0 0.0
    %127 = vmatpush1.msra.mxu0 %v91
    %128 = vmatprep.subr.mxu0 0.0
    %129 = vmatpush1.msra.mxu0 0.0
    %130 = vmatprep.subr.mxu0 0.0
    %131 = vmatpush1.msra.mxu0 0.0
    %132 = vmatprep.subr.mxu0 0.0
    %133 = vmatpush1.msra.mxu0 0.0
    %134 = vmatprep.subr.mxu0 0.0
    %135 = vmatpush1.msra.mxu0 0.0
    %136 = vmatprep.subr.mxu0 0.0
    %137 = vmatpush1.msra.mxu0 0.0
    %138 = vmatprep.subr.mxu0 0.0
    %139 = vmatpush1.msra.mxu0 0.0
    %140 = vmatprep.subr.mxu0 0.0
    %141 = vmatpush1.msra.mxu0 0.0
    %142 = vmatprep.subr.mxu0 0.0
    %143 = vmatpush1.msra.mxu0 0.0
    %144 = vmatprep.subr.mxu0 0.0
    %145 = vmatpush1.msra.mxu0 0.0
    %146 = vmatprep.subr.mxu0 0.0
    %147 = vmatpush1.msra.mxu0 0.0
    %148 = vmatprep.subr.mxu0 0.0
    %149 = vmatpush1.msra.mxu0 0.0
    %150 = vmatprep.subr.mxu0 0.0
    %151 = vmatpush1.msra.mxu0 0.0
    %152 = vmatprep.subr.mxu0 0.0
    %153 = vmatpush1.msra.mxu0 0.0
    %154 = vmatprep.subr.mxu0 0.0
    %155 = vmatpush1.msra.mxu0 0.0
    %156 = vmatprep.subr.mxu0 0.0
    %157 = vmatpush1.msra.mxu0 0.0
    %158 = vmatprep.subr.mxu0 0.0
    %159 = vmatpush1.msra.mxu0 0.0
    %160 = vmatprep.mubr.f32.mxu0 0.0
    %161 = vmatmul.mubr.f32.gmra.mrb[0].mxu0 %v75
    %v162 = vpop.f32.mrb[0].mxu0
    %v163 = vadd.f32 %v95, %v162
    %v164 = vpop.f32.mrb[0].mxu0
    %165 = vdwg.mxu0
    %v166 = vmax.f32 %v163, 0.0
    %v167 = vld [vmem:[#allocation7] sm:$0xff]
    %v168 = vld [vmem:[#allocation7 + $0x8] sm:$0xff]
    %v169 = vld [vmem:[#allocation7 + $0x10] sm:$0xff]
    %v170 = vld [vmem:[#allocation7 + $0x18] sm:$0xff]
    %v171 = vld [vmem:[#allocation7 + $0x20] sm:$0xff]
    %v172 = vld [vmem:[#allocation7 + $0x28] sm:$0xff]
    %v173 = vld [vmem:[#allocation7 + $0x30] sm:$0xff]
    %v174 = vld [vmem:[#allocation7 + $0x38] sm:$0xff]
    %v175 = vld [vmem:[#allocation7 + $0x40] sm:$0xff]
    %v176 = vld [vmem:[#allocation7 + $0x48] sm:$0xff]
    %v177 = vld [vmem:[#allocation7 + $0x50] sm:$0xff]
    %v178 = vld [vmem:[#allocation7 + $0x58] sm:$0xff]
    %v179 = vld [vmem:[#allocation7 + $0x60] sm:$0xff]
    %v180 = vld [vmem:[#allocation7 + $0x68] sm:$0xff]
    %v181 = vld [vmem:[#allocation7 + $0x70] sm:$0xff]
    %v182 = vld [vmem:[#allocation7 + $0x78] sm:$0xff]
    %v183 = vlaneseq
    %v184 = vshrl.u32 %v183, 7
    %v185 = vsub.s32 1, %v184
    %v186 = vrot.slane %v74, %v185
    %187 = vmatprep.subr.mxu0 0.0
    %188 = vmatpush1.msra.mxu0 %v167
    %189 = vmatprep.subr.mxu0 0.0
    %190 = vmatpush1.msra.mxu0 %v168
    %191 = vmatprep.subr.mxu0 0.0
    %192 = vmatpush1.msra.mxu0 %v169
    %193 = vmatprep.subr.mxu0 0.0
    %194 = vmatpush1.msra.mxu0 %v170
    %195 = vmatprep.subr.mxu0 0.0
    %196 = vmatpush1.msra.mxu0 %v171
    %197 = vmatprep.subr.mxu0 0.0
    %198 = vmatpush1.msra.mxu0 %v172
    %199 = vmatprep.subr.mxu0 0.0
    %200 = vmatpush1.msra.mxu0 %v173
    %201 = vmatprep.subr.mxu0 0.0
    %202 = vmatpush1.msra.mxu0 %v174
    %203 = vmatprep.subr.mxu0 0.0
    %204 = vmatpush1.msra.mxu0 %v175
    %205 = vmatprep.subr.mxu0 0.0
    %206 = vmatpush1.msra.mxu0 %v176
    %207 = vmatprep.subr.mxu0 0.0
    %208 = vmatpush1.msra.mxu0 %v177
    %209 = vmatprep.subr.mxu0 0.0
    %210 = vmatpush1.msra.mxu0 %v178
    %211 = vmatprep.subr.mxu0 0.0
    %212 = vmatpush1.msra.mxu0 %v179
    %213 = vmatprep.subr.mxu0 0.0
    %214 = vmatpush1.msra.mxu0 %v180
    %215 = vmatprep.subr.mxu0 0.0
    %216 = vmatpush1.msra.mxu0 %v181
    %217 = vmatprep.subr.mxu0 0.0
    %218 = vmatpush1.msra.mxu0 %v182
    %219 = vmatprep.subr.mxu0 0.0
    %220 = vmatpush1.msra.mxu0 0.0
    %221 = vmatprep.subr.mxu0 0.0
    %222 = vmatpush1.msra.mxu0 0.0
    %223 = vmatprep.subr.mxu0 0.0
    %224 = vmatpush1.msra.mxu0 0.0
    %225 = vmatprep.subr.mxu0 0.0
    %226 = vmatpush1.msra.mxu0 0.0
    %227 = vmatprep.subr.mxu0 0.0
    %228 = vmatpush1.msra.mxu0 0.0
    %229 = vmatprep.subr.mxu0 0.0
    %230 = vmatpush1.msra.mxu0 0.0
    %231 = vmatprep.subr.mxu0 0.0
    %232 = vmatpush1.msra.mxu0 0.0
    %233 = vmatprep.subr.mxu0 0.0
    %234 = vmatpush1.msra.mxu0 0.0
    %235 = vmatprep.subr.mxu0 0.0
    %236 = vmatpush1.msra.mxu0 0.0
    %237 = vmatprep.subr.mxu0 0.0
    %238 = vmatpush1.msra.mxu0 0.0
    %239 = vmatprep.subr.mxu0 0.0
    %240 = vmatpush1.msra.mxu0 0.0
    %241 = vmatprep.subr.mxu0 0.0
    %242 = vmatpush1.msra.mxu0 0.0
    %243 = vmatprep.subr.mxu0 0.0
    %244 = vmatpush1.msra.mxu0 0.0
    %245 = vmatprep.subr.mxu0 0.0
    %246 = vmatpush1.msra.mxu0 0.0
    %247 = vmatprep.subr.mxu0 0.0
    %248 = vmatpush1.msra.mxu0 0.0
    %249 = vmatprep.subr.mxu0 0.0
    %250 = vmatpush1.msra.mxu0 0.0
    %251 = vmatprep.mubr.f32.mxu0 0.0
    %252 = vmatmul.mubr.f32.gmra.mrb[0].mxu0 %v166
    %v253 = vpop.f32.mrb[0].mxu0
    %v254 = vadd.f32 %v186, %v253
    %v255 = vpop.f32.mrb[0].mxu0
    %256 = vdwg.mxu0
    %v257 = vmax.f32 %v254, 0.0
    %v258 = vld [vmem:[#allocation8] sm:$0xff]
    %v259 = vld [vmem:[#allocation8 + $0x8] sm:$0xff]
    %v260 = vld [vmem:[#allocation8 + $0x10] sm:$0xff]
    %v261 = vld [vmem:[#allocation8 + $0x18] sm:$0xff]
    %v262 = vld [vmem:[#allocation8 + $0x20] sm:$0xff]
    %v263 = vld [vmem:[#allocation8 + $0x28] sm:$0xff]
    %v264 = vld [vmem:[#allocation8 + $0x30] sm:$0xff]
    %v265 = vld [vmem:[#allocation8 + $0x38] sm:$0xff]
    %v266 = vld [vmem:[#allocation8 + $0x40] sm:$0xff]
    %v267 = vld [vmem:[#allocation8 + $0x48] sm:$0xff]
    %v268 = vld [vmem:[#allocation8 + $0x50] sm:$0xff]
    %v269 = vld [vmem:[#allocation8 + $0x58] sm:$0xff]
    %v270 = vld [vmem:[#allocation8 + $0x60] sm:$0xff]
    %v271 = vld [vmem:[#allocation8 + $0x68] sm:$0xff]
    %v272 = vld [vmem:[#allocation8 + $0x70] sm:$0xff]
    %v273 = vld [vmem:[#allocation8 + $0x78] sm:$0xff]
    %v274 = vlaneseq
    %v275 = vshrl.u32 %v274, 7
    %v276 = vsub.s32 2, %v275
    %v277 = vrot.slane %v74, %v276
    %278 = vmatprep.subr.mxu0 0.0
    %279 = vmatpush1.msra.mxu0 %v258
    %280 = vmatprep.subr.mxu0 0.0
    %281 = vmatpush1.msra.mxu0 %v259
    %282 = vmatprep.subr.mxu0 0.0
    %283 = vmatpush1.msra.mxu0 %v260
    %284 = vmatprep.subr.mxu0 0.0
    %285 = vmatpush1.msra.mxu0 %v261
    %286 = vmatprep.subr.mxu0 0.0
    %287 = vmatpush1.msra.mxu0 %v262
    %288 = vmatprep.subr.mxu0 0.0
    %289 = vmatpush1.msra.mxu0 %v263
    %290 = vmatprep.subr.mxu0 0.0
    %291 = vmatpush1.msra.mxu0 %v264
    %292 = vmatprep.subr.mxu0 0.0
    %293 = vmatpush1.msra.mxu0 %v265
    %294 = vmatprep.subr.mxu0 0.0
    %295 = vmatpush1.msra.mxu0 %v266
    %296 = vmatprep.subr.mxu0 0.0
    %297 = vmatpush1.msra.mxu0 %v267
    %298 = vmatprep.subr.mxu0 0.0
    %299 = vmatpush1.msra.mxu0 %v268
    %300 = vmatprep.subr.mxu0 0.0
    %301 = vmatpush1.msra.mxu0 %v269
    %302 = vmatprep.subr.mxu0 0.0
    %303 = vmatpush1.msra.mxu0 %v270
    %304 = vmatprep.subr.mxu0 0.0
    %305 = vmatpush1.msra.mxu0 %v271
    %306 = vmatprep.subr.mxu0 0.0
    %307 = vmatpush1.msra.mxu0 %v272
    %308 = vmatprep.subr.mxu0 0.0
    %309 = vmatpush1.msra.mxu0 %v273
    %310 = vmatprep.subr.mxu0 0.0
    %311 = vmatpush1.msra.mxu0 0.0
    %312 = vmatprep.subr.mxu0 0.0
    %313 = vmatpush1.msra.mxu0 0.0
    %314 = vmatprep.subr.mxu0 0.0
    %315 = vmatpush1.msra.mxu0 0.0
    %316 = vmatprep.subr.mxu0 0.0
    %317 = vmatpush1.msra.mxu0 0.0
    %318 = vmatprep.subr.mxu0 0.0
    %319 = vmatpush1.msra.mxu0 0.0
    %320 = vmatprep.subr.mxu0 0.0
    %321 = vmatpush1.msra.mxu0 0.0
    %322 = vmatprep.subr.mxu0 0.0
    %323 = vmatpush1.msra.mxu0 0.0
    %324 = vmatprep.subr.mxu0 0.0
    %325 = vmatpush1.msra.mxu0 0.0
    %326 = vmatprep.subr.mxu0 0.0
    %327 = vmatpush1.msra.mxu0 0.0
    %328 = vmatprep.subr.mxu0 0.0
    %329 = vmatpush1.msra.mxu0 0.0
    %330 = vmatprep.subr.mxu0 0.0
    %331 = vmatpush1.msra.mxu0 0.0
    %332 = vmatprep.subr.mxu0 0.0
    %333 = vmatpush1.msra.mxu0 0.0
    %334 = vmatprep.subr.mxu0 0.0
    %335 = vmatpush1.msra.mxu0 0.0
    %336 = vmatprep.subr.mxu0 0.0
    %337 = vmatpush1.msra.mxu0 0.0
    %338 = vmatprep.subr.mxu0 0.0
    %339 = vmatpush1.msra.mxu0 0.0
    %340 = vmatprep.subr.mxu0 0.0
    %341 = vmatpush1.msra.mxu0 0.0
    %342 = vmatprep.mubr.f32.mxu0 0.0
    %343 = vmatmul.mubr.f32.gmra.mrb[0].mxu0 %v257
    %v344 = vpop.f32.mrb[0].mxu0
    %v345 = vadd.f32 %v277, %v344
    %v346 = vpop.f32.mrb[0].mxu0
    %347 = vdwg.mxu0
    %348 = vst [vmem:[#allocation10] sm:$0xff] %v345
    // Predicated region
    $region38: #{tpu_custom_call.1} parent=1 // pred_check
      _
    $region39: #{tpu_custom_call.1} parent=1 // pred_check_branch
      %350 = sbr.rel (0) target = $region41
    $region40: #{tpu_custom_call.1} parent=1 // pred_region
      %s352 = ssub.s32 128, 128
      %353 = vsyncadd [#allocation4], %s352
      %s355 = sshll.u32 [#allocation10], 4
      %s356 = int_to_ptr.vmem [resolvable:$true] %s355
      %358 = dma.vmem_to_hbm [thread:$0]  %s356, 128, %s5, [#allocation4]
    $region41: #{tpu_custom_call.1} parent=1 // pred_fallthru
      _
    // Predicated region
    $region42: #{tpu_custom_call.1} parent=1 // pred_check
      _
    $region43: #{tpu_custom_call.1} parent=1 // pred_check_branch
      %360 = sbr.rel (0) target = $region45
    $region44: #{tpu_custom_call.1} parent=1 // pred_region
      %361 = dma.done [#allocation4], 128
    $region45: #{tpu_custom_call.1} parent=1 // pred_fallthru
      _
    %362 = vsyncpa [#allocation3], 1
    %363 = vsyncpa [#allocation6], 1
    %364 = vsyncpa [#allocation9], 1
    %365 = vsyncpa [#allocation4], 1

</llo_original>
